<compile_context>
chip_gen: v7x
topology: tpu7x:2x2x1
jax: 0.10.0
libtpu: 0.0.40
codegen_flags: <defaults>
</compile_context>

<pallas_src>
import jax
import jax.numpy as jnp
from jax.experimental import pallas as pl
from jax.experimental.pallas import tpu as pltpu


def _sync_kernel(a_hbm, b_hbm, oa_hbm, ob_hbm, sems):
    # Placeholder "synchronization": pass both bit streams through unchanged
    # as two concurrent HBM->HBM DMAs (no VMEM staging, no VPU work).
    cp_a = pltpu.make_async_copy(a_hbm, oa_hbm, sems.at[0])
    cp_b = pltpu.make_async_copy(b_hbm, ob_hbm, sems.at[1])
    cp_a.start()
    cp_b.start()
    cp_a.wait()
    cp_b.wait()


def sync_streams(a, b):
    """Run the placeholder Sync kernel over two identically-shaped bit streams.

    Pure HBM->HBM DMA copy: works for any shape/length with ~zero VMEM use on
    every TPU generation (v5e / v6e / v7x).
    """
    assert a.shape == b.shape and a.dtype == b.dtype, (
        "Sync expects two streams of identical shape and dtype")

    itemsize = jnp.dtype(a.dtype).itemsize
    nbytes = int(a.size) * itemsize

    hbm_spec = pl.BlockSpec(memory_space=pl.ANY)
    out_shape = jax.ShapeDtypeStruct(a.shape, a.dtype)

    return pl.pallas_call(
        _sync_kernel,
        in_specs=[hbm_spec, hbm_spec],
        out_specs=(hbm_spec, hbm_spec),
        out_shape=(out_shape, out_shape),
        scratch_shapes=[pltpu.SemaphoreType.DMA((2,))],
        cost_estimate=pl.CostEstimate(
            flops=0,
            transcendentals=0,
            bytes_accessed=4 * nbytes,  # 2 reads + 2 writes
        ),
    )(a, b)


class Sync:
    """JAX/Pallas mirror of the (unimplemented) PyTorch Sync module."""

    def __init__(self, prob, bitwidth=8, mode="bipolar"):
        # Reference raises ValueError here; we keep the object constructible so
        # the script is runnable, but record the configuration.
        self.prob = prob
        self.bitwidth = bitwidth
        self.mode = mode

    def forward(self):
        # Exact reference semantics: forward() returns None.
        return None


if __name__ == "__main__":
    key = jax.random.PRNGKey(0)
    ka, kb = jax.random.split(key)

    # Two synthetic bit streams: [N=8, L=128] of {0, 1} in uint8.
    N, L = 8, 128
    a = (jax.random.uniform(ka, (N, L)) < 0.5).astype(jnp.uint8)
    b = (jax.random.uniform(kb, (N, L)) < 0.5).astype(jnp.uint8)

    # Module forward (matches PyTorch: returns None).
    sync = Sync(prob=0.5, bitwidth=8, mode="bipolar")
    assert sync.forward() is None

    # Placeholder Pallas kernel pass (direct HBM->HBM DMA copy).
    oa, ob = sync_streams(a, b)
    jax.block_until_ready((oa, ob))
    assert bool(jnp.all(oa == a)) and bool(jnp.all(ob == b))

    print("KERNEL_OK")
</pallas_src>

<mosaic_0001>
module attributes {stable_mosaic.version = 11 : i64} {
  func.func @_sync_kernel(%arg0: memref<8x128xi8, #tpu.memory_space<any>>, %arg1: memref<8x128xi8, #tpu.memory_space<any>>, %arg2: memref<8x128xi8, #tpu.memory_space<any>>, %arg3: memref<8x128xi8, #tpu.memory_space<any>>, %arg4: memref<2x!tpu.dma_semaphore, #tpu.memory_space<semaphore_mem>>) attributes {dimension_semantics = [], scalar_prefetch = 0 : i64, scratch_operands = 1 : i64, tpu.core_type = #tpu.core_type<tc>} {
    %c0_i32 = arith.constant 0 : i32
    %0 = tpu.memref_slice %arg4[%c0_i32] : memref<2x!tpu.dma_semaphore, #tpu.memory_space<semaphore_mem>> -> memref<1x!tpu.dma_semaphore, #tpu.memory_space<semaphore_mem>>
    %1 = tpu.memref_squeeze %0 : memref<1x!tpu.dma_semaphore, #tpu.memory_space<semaphore_mem>> -> memref<!tpu.dma_semaphore, #tpu.memory_space<semaphore_mem>>
    tpu.enqueue_dma source(%arg0 : memref<8x128xi8, #tpu.memory_space<any>>) target(%arg2 : memref<8x128xi8, #tpu.memory_space<any>>) target_semaphore(%1 : memref<!tpu.dma_semaphore, #tpu.memory_space<semaphore_mem>>)
    %c1_i32 = arith.constant 1 : i32
    %2 = tpu.memref_slice %arg4[%c1_i32] : memref<2x!tpu.dma_semaphore, #tpu.memory_space<semaphore_mem>> -> memref<1x!tpu.dma_semaphore, #tpu.memory_space<semaphore_mem>>
    %3 = tpu.memref_squeeze %2 : memref<1x!tpu.dma_semaphore, #tpu.memory_space<semaphore_mem>> -> memref<!tpu.dma_semaphore, #tpu.memory_space<semaphore_mem>>
    tpu.enqueue_dma source(%arg1 : memref<8x128xi8, #tpu.memory_space<any>>) target(%arg3 : memref<8x128xi8, #tpu.memory_space<any>>) target_semaphore(%3 : memref<!tpu.dma_semaphore, #tpu.memory_space<semaphore_mem>>)
    %c0_i32_0 = arith.constant 0 : i32
    %4 = tpu.memref_slice %arg4[%c0_i32_0] : memref<2x!tpu.dma_semaphore, #tpu.memory_space<semaphore_mem>> -> memref<1x!tpu.dma_semaphore, #tpu.memory_space<semaphore_mem>>
    %5 = tpu.memref_squeeze %4 : memref<1x!tpu.dma_semaphore, #tpu.memory_space<semaphore_mem>> -> memref<!tpu.dma_semaphore, #tpu.memory_space<semaphore_mem>>
    tpu.wait_dma2 semaphore(%5 : memref<!tpu.dma_semaphore, #tpu.memory_space<semaphore_mem>>) src(%arg0 : memref<8x128xi8, #tpu.memory_space<any>>) dst(%arg2 : memref<8x128xi8, #tpu.memory_space<any>>)
    %c1_i32_1 = arith.constant 1 : i32
    %6 = tpu.memref_slice %arg4[%c1_i32_1] : memref<2x!tpu.dma_semaphore, #tpu.memory_space<semaphore_mem>> -> memref<1x!tpu.dma_semaphore, #tpu.memory_space<semaphore_mem>>
    %7 = tpu.memref_squeeze %6 : memref<1x!tpu.dma_semaphore, #tpu.memory_space<semaphore_mem>> -> memref<!tpu.dma_semaphore, #tpu.memory_space<semaphore_mem>>
    tpu.wait_dma2 semaphore(%7 : memref<!tpu.dma_semaphore, #tpu.memory_space<semaphore_mem>>) src(%arg1 : memref<8x128xi8, #tpu.memory_space<any>>) dst(%arg3 : memref<8x128xi8, #tpu.memory_space<any>>)
    return
  }
}

</mosaic_0001>

<llo_original>
// kernel: tpu_custom_call.1
$region0: #{tpu_custom_call.1}
  #allocation0 [shape = 'u32[]', space=smem, size = 0x4, offset = 0x4, fixed_abs, tag = 'smem constant byte address 0x4 - core index']
  #allocation1 [shape = 'u32[144,128]{1,0:T(1,128)}', space=vmem, size = 0x12000, scoped, tag = 'internal scratch']
  #allocation2 [shape = 's32[2]{0}', space=sflag, size = 0x8, scoped, tag = 'scratch operand']
  #allocation3 [shape = 's32[]', space=sflag, size = 0x4, offset = 0, fixed_abs, tag = 'sflag constant byte address 0x0 - dummy sync flag']
  #allocation4 [shape = 'u32[0]{0}', space=smem, size = 0, offset = 0, fixed_abs, tag = 'smem constant byte address 0x0 - null']
  #allocation5 [shape = 's32[]', space=sflag, size = 0x4, offset = 0, fixed_abs, tag = 'sflag constant byte address 0x0 - dummy sync flag']
  #allocation6 [shape = 's32[]', space=sflag, size = 0x4, offset = 0, fixed_abs, tag = 'sflag constant byte address 0x0 - dummy sync flag']
  #allocation7 [shape = 'u32[]', space=smem, size = 0x4, offset = 0x44, fixed_abs, tag = 'smem constant byte address 0x44 - assertion arg 0']
  #allocation8 [shape = 'u32[]', space=smem, size = 0x4, offset = 0x48, fixed_abs, tag = 'smem constant byte address 0x48 - assertion arg 1']
  %s0 = inlined_call_operand.hbm [shape: u8[8,128], index: 0, kind: input, shape index: {}]
  %s1 = inlined_call_operand.vmem [shape: u8[8,128], index: 1, kind: input, shape index: {}]
  %s2 = inlined_call_operand.hbm [shape: u8[8,128], index: 2, kind: output, shape index: {0}]
  %s3 = inlined_call_operand.hbm [shape: u8[8,128], index: 3, kind: output, shape index: {1}]
  %4 = xla_tuple %s2, %s3
  %s5 = sld [smem:[#allocation0]]
  $region6: #{tpu_custom_call.1} parent=0
    _
  %s7 = ssub.s32 1, %s5
  %s8 = scalar_select 0, %s7, %s5
  %s10 = sshll.u32 1, 14
  %s11 = sxor.u32 4294967295, %s10
  %s14 = sshll.u32 3, 24
  %s15 = sxor.u32 4294967295, %s14
  %s16 = sand.u32 0, %s15
  %s18 = sor.u32 %s16, 0
  %21 = dma.general %s0, 32, %s2, [#allocation2], [#allocation3], [#allocation4], %s18, 0
  %s22 = scalar_lea.sflag [#allocation2], 1
  // Predicated region
  $region2: #{tpu_custom_call.1} parent=0 // pred_check
    _
  $region3: #{tpu_custom_call.1} parent=0 // pred_check_branch
    %24 = sbr.rel target = $region5
  $region4: #{tpu_custom_call.1} parent=0 // pred_region
    %25 = sst [smem:[#allocation7]] [#allocation6]
    %26 = sst [smem:[#allocation8]] [#allocation5]
  $region5: #{tpu_custom_call.1} parent=0 // pred_fallthru
    _
  %28 = shalt.err (0)
  %s30 = sshll.u32 %s1, 4
  %s31 = int_to_ptr.vmem [resolvable:$true] %s30
  %33 = dma.vmem_to_hbm [thread:$0]  %s31, 32, %s3, %s22
  %s34 = smul.u32 2, 1
  %s35 = smul.u32 %s34, 1
  %s36 = sshll.u32 %s35, 4
  %37 = dma.done [#allocation2], %s36
  %s38 = sshll.u32 %s35, 4
  %39 = dma.done %s22, %s38
  %40 = vsyncmov [#allocation2]
  %s41 = vpop.sfrf %40
  %p42 = scmp.eq.s32.totalorder %s41, 0
  %p43 = pneg %p42
  %45 = shalt.err (%p43)
  %s46 = scalar_lea.sflag [#allocation2], 1
  %47 = vsyncmov %s46
  %s48 = vpop.sfrf %47
  %p49 = scmp.eq.s32.totalorder %s48, 0
  %p50 = pneg %p49
  %52 = shalt.err (%p50)

</llo_original>
